<compile_context>
chip_gen: v7x
topology: tpu7x:2x2x1
jax: 0.10.0
libtpu: 0.0.40
codegen_flags: <defaults>
</compile_context>

<pallas_src>
import functools
import math

import jax
import jax.numpy as jnp
from jax.experimental import pallas as pl
from jax.experimental.pallas import tpu as pltpu

_SQRT_HALF = 0.7071067811865476


def _erf_approx(x):
    """Abramowitz & Stegun 7.1.26 erf approximation (|err| <= 1.5e-7).

    Uses only exp / mul / add / select, which lower cleanly in Mosaic on
    v5e / v6e / v7x (avoids relying on a lax.erf lowering rule).
    """
    a1, a2, a3, a4, a5 = (0.254829592, -0.284496736, 1.421413741,
                          -1.453152027, 1.061405429)
    p = 0.3275911
    ax = jnp.abs(x)
    t = 1.0 / (1.0 + p * ax)
    poly = ((((a5 * t + a4) * t + a3) * t + a2) * t + a1) * t
    y = 1.0 - poly * jnp.exp(-ax * ax)
    return jnp.where(x >= 0.0, y, -y)


def _gelu_exact(x):
    """PyTorch nn.GELU() default: 0.5 * x * (1 + erf(x / sqrt(2)))."""
    return 0.5 * x * (1.0 + _erf_approx(x * _SQRT_HALF))


def _ffn_kernel(x_ref, w1_ref, b1_ref, w2_ref, b2_ref, o_ref):
    """Eval-mode FFN tile: (tm, D) @ (D, F) -> GELU -> (tm, F) @ (F, D)."""
    x = x_ref[...]                                                # (tm, D)
    h = jnp.dot(x, w1_ref[...], preferred_element_type=jnp.float32)
    h = _gelu_exact(h + b1_ref[...])                              # (tm, F)
    o = jnp.dot(h, w2_ref[...], preferred_element_type=jnp.float32)
    o_ref[...] = (o + b2_ref[...]).astype(o_ref.dtype)            # (tm, D)


def _ffn_dropout_kernel(seed_ref, x_ref, w1_ref, b1_ref, w2_ref, b2_ref,
                        o_ref, *, dropout_p):
    """Training-mode FFN tile with inverted dropout via the on-chip PRNG."""
    x = x_ref[...]
    h = jnp.dot(x, w1_ref[...], preferred_element_type=jnp.float32)
    h = _gelu_exact(h + b1_ref[...])
    # Per-tile unique stream: base seed + grid position.
    pltpu.prng_seed(seed_ref[0] + pl.program_id(0))
    bits = pltpu.bitcast(pltpu.prng_random_bits(h.shape), jnp.uint32)
    u = (bits >> jnp.uint32(9)).astype(jnp.float32) * (1.0 / (1 << 23))
    keep = u >= jnp.float32(dropout_p)
    h = jnp.where(keep, h * (1.0 / (1.0 - dropout_p)), 0.0)
    o = jnp.dot(h, w2_ref[...], preferred_element_type=jnp.float32)
    o_ref[...] = (o + b2_ref[...]).astype(o_ref.dtype)


def _round_up(a: int, m: int) -> int:
    return -(-a // m) * m


def feed_forward(x, w1, b1, w2, b2, *, dropout_p: float = 0.1,
                 training: bool = False, dropout_seed: int = 0,
                 block_tokens: int = 256):
    """Equivalent of FeedForward.forward.

    x:  (..., d_model) float32
    w1: (d_model, d_ff), b1: (d_ff,)   -- already transposed vs. torch Linear
    w2: (d_ff, d_model), b2: (d_model,)
    """
    orig_shape = x.shape
    d_model = orig_shape[-1]
    d_ff = w1.shape[1]
    assert w1.shape == (d_model, d_ff)
    assert w2.shape == (d_ff, d_model)

    # Flatten all leading dims into one token axis and tile it.
    xf = x.reshape(-1, d_model)
    n = xf.shape[0]
    tm = min(block_tokens, _round_up(n, 8))
    n_pad = _round_up(n, tm)
    if n_pad != n:
        xf = jnp.pad(xf, ((0, n_pad - n), (0, 0)))

    grid = (n_pad // tm,)

    x_spec = pl.BlockSpec((tm, d_model), lambda i: (i, 0))
    w1_spec = pl.BlockSpec((d_model, d_ff), lambda i: (0, 0))   # VMEM-resident
    b1_spec = pl.BlockSpec((1, d_ff), lambda i: (0, 0))
    w2_spec = pl.BlockSpec((d_ff, d_model), lambda i: (0, 0))   # VMEM-resident
    b2_spec = pl.BlockSpec((1, d_model), lambda i: (0, 0))
    out_spec = pl.BlockSpec((tm, d_model), lambda i: (i, 0))

    in_specs = [x_spec, w1_spec, b1_spec, w2_spec, b2_spec]
    args = (xf, w1, b1.reshape(1, d_ff), w2, b2.reshape(1, d_model))

    if training and dropout_p > 0.0:
        kernel = functools.partial(_ffn_dropout_kernel,
                                   dropout_p=float(dropout_p))
        in_specs = [pl.BlockSpec(memory_space=pltpu.MemorySpace.SMEM)] + in_specs
        args = (jnp.asarray([dropout_seed], dtype=jnp.int32),) + args
    else:
        kernel = _ffn_kernel  # eval: dropout is the identity

    out = pl.pallas_call(
        kernel,
        out_shape=jax.ShapeDtypeStruct((n_pad, d_model), x.dtype),
        grid_spec=pltpu.PrefetchScalarGridSpec(
            num_scalar_prefetch=0,
            grid=grid,
            in_specs=in_specs,
            out_specs=out_spec,
        ),
        compiler_params=pltpu.CompilerParams(
            dimension_semantics=("parallel",),
        ),
    )(*args)

    return out[:n].reshape(orig_shape)


def init_linear(key, in_features: int, out_features: int):
    """torch.nn.Linear default init (U(-1/sqrt(in), 1/sqrt(in))).

    Weight is stored as (in_features, out_features) so the kernel computes
    x @ W (torch stores (out, in) and computes x @ W.T).
    """
    k_w, k_b = jax.random.split(key)
    bound = 1.0 / math.sqrt(in_features)
    w = jax.random.uniform(k_w, (in_features, out_features), jnp.float32,
                           -bound, bound)
    b = jax.random.uniform(k_b, (out_features,), jnp.float32, -bound, bound)
    return w, b


if __name__ == "__main__":
    # Small shapes consistent with the module: batch=2, seq=8, d_model=32, d_ff=64.
    d_model, d_ff = 32, 64
    batch, seq = 2, 8

    key = jax.random.PRNGKey(0)
    k1, k2, kx = jax.random.split(key, 3)
    w1, b1 = init_linear(k1, d_model, d_ff)
    w2, b2 = init_linear(k2, d_ff, d_model)
    x = jax.random.normal(kx, (batch, seq, d_model), dtype=jnp.float32)

    # Eval-mode forward (dropout = identity), matching inference semantics.
    out = feed_forward(x, w1, b1, w2, b2, dropout_p=0.1, training=False)
    out = jax.block_until_ready(out)

    # Pure-JAX reference: Linear -> exact GELU -> (no dropout) -> Linear.
    h = jnp.dot(x.reshape(-1, d_model), w1) + b1
    h = 0.5 * h * (1.0 + jax.lax.erf(h * _SQRT_HALF))
    ref = (jnp.dot(h, w2) + b2).reshape(batch, seq, d_model)

    assert out.shape == (batch, seq, d_model)
    assert jnp.allclose(out, ref, atol=1e-4, rtol=1e-4), float(
        jnp.max(jnp.abs(out - ref)))

    print("KERNEL_OK")
</pallas_src>

<mosaic_0001>
module attributes {stable_mosaic.version = 11 : i64} {
  func.func @_ffn_kernel(%arg0: i32, %arg1: memref<16x32xf32, #tpu.memory_space<vmem>>, %arg2: memref<32x64xf32, #tpu.memory_space<vmem>>, %arg3: memref<1x64xf32, #tpu.memory_space<vmem>>, %arg4: memref<64x32xf32, #tpu.memory_space<vmem>>, %arg5: memref<1x32xf32, #tpu.memory_space<vmem>>, %arg6: memref<16x32xf32, #tpu.memory_space<vmem>>) attributes {dimension_semantics = [#tpu.dimension_semantics<parallel>], iteration_bounds = array<i64: 1>, scalar_prefetch = 0 : i64, scratch_operands = 0 : i64, tpu.core_type = #tpu.core_type<tc>, window_params = [{transform_indices = @transform_0, window_bounds = array<i64: 16, 32>}, {pipeline_mode = #tpu.pipeline_mode<synchronous>, transform_indices = @transform_1, window_bounds = array<i64: 32, 64>}, {pipeline_mode = #tpu.pipeline_mode<synchronous>, transform_indices = @transform_2, window_bounds = array<i64: 1, 64>}, {pipeline_mode = #tpu.pipeline_mode<synchronous>, transform_indices = @transform_3, window_bounds = array<i64: 64, 32>}, {pipeline_mode = #tpu.pipeline_mode<synchronous>, transform_indices = @transform_4, window_bounds = array<i64: 1, 32>}, {transform_indices = @transform_5, window_bounds = array<i64: 16, 32>}]} {
    %c0 = arith.constant 0 : index
    %c0_0 = arith.constant 0 : index
    %0 = vector.load %arg1[%c0, %c0_0] : memref<16x32xf32, #tpu.memory_space<vmem>>, vector<16x32xf32>
    %c0_1 = arith.constant 0 : index
    %c0_2 = arith.constant 0 : index
    %1 = vector.load %arg2[%c0_1, %c0_2] : memref<32x64xf32, #tpu.memory_space<vmem>>, vector<32x64xf32>
    %cst = arith.constant dense<0.000000e+00> : vector<16x64xf32>
    %2 = tpu.matmul %0, %1, %cst {dimension_numbers = #tpu.dot_dimension_numbers<[1], [0], [0], [1], [0, 0, 1, 1], [], []>} : vector<16x32xf32>, vector<32x64xf32>, vector<16x64xf32> -> vector<16x64xf32>
    %c0_3 = arith.constant 0 : index
    %c0_4 = arith.constant 0 : index
    %3 = vector.load %arg3[%c0_3, %c0_4] : memref<1x64xf32, #tpu.memory_space<vmem>>, vector<1x64xf32>
    %4 = vector.broadcast %3 : vector<1x64xf32> to vector<16x64xf32>
    %5 = arith.addf %2, %4 : vector<16x64xf32>
    %cst_5 = arith.constant 5.000000e-01 : f32
    %6 = vector.broadcast %cst_5 : f32 to vector<16x64xf32>
    %7 = arith.mulf %6, %5 : vector<16x64xf32>
    %cst_6 = arith.constant 0.707106769 : f32
    %8 = vector.broadcast %cst_6 : f32 to vector<16x64xf32>
    %9 = arith.mulf %5, %8 : vector<16x64xf32>
    %10 = math.absf %9 : vector<16x64xf32>
    %cst_7 = arith.constant 0.327591091 : f32
    %11 = vector.broadcast %cst_7 : f32 to vector<16x64xf32>
    %12 = arith.mulf %11, %10 : vector<16x64xf32>
    %cst_8 = arith.constant 1.000000e+00 : f32
    %13 = vector.broadcast %cst_8 : f32 to vector<16x64xf32>
    %14 = arith.addf %13, %12 : vector<16x64xf32>
    %cst_9 = arith.constant 1.000000e+00 : f32
    %15 = vector.broadcast %cst_9 : f32 to vector<16x64xf32>
    %16 = arith.divf %15, %14 : vector<16x64xf32>
    %cst_10 = arith.constant 1.06140542 : f32
    %17 = vector.broadcast %cst_10 : f32 to vector<16x64xf32>
    %18 = arith.mulf %17, %16 : vector<16x64xf32>
    %cst_11 = arith.constant -1.45315206 : f32
    %19 = vector.broadcast %cst_11 : f32 to vector<16x64xf32>
    %20 = arith.addf %18, %19 : vector<16x64xf32>
    %21 = arith.mulf %20, %16 : vector<16x64xf32>
    %cst_12 = arith.constant 1.42141378 : f32
    %22 = vector.broadcast %cst_12 : f32 to vector<16x64xf32>
    %23 = arith.addf %21, %22 : vector<16x64xf32>
    %24 = arith.mulf %23, %16 : vector<16x64xf32>
    %cst_13 = arith.constant -0.284496725 : f32
    %25 = vector.broadcast %cst_13 : f32 to vector<16x64xf32>
    %26 = arith.addf %24, %25 : vector<16x64xf32>
    %27 = arith.mulf %26, %16 : vector<16x64xf32>
    %cst_14 = arith.constant 0.254829586 : f32
    %28 = vector.broadcast %cst_14 : f32 to vector<16x64xf32>
    %29 = arith.addf %27, %28 : vector<16x64xf32>
    %30 = arith.mulf %29, %16 : vector<16x64xf32>
    %cst_15 = arith.constant 0.000000e+00 : f32
    %31 = vector.broadcast %cst_15 : f32 to vector<16x64xf32>
    %32 = arith.subf %31, %10 : vector<16x64xf32>
    %33 = arith.mulf %32, %10 : vector<16x64xf32>
    %34 = math.exp %33 : vector<16x64xf32>
    %35 = arith.mulf %30, %34 : vector<16x64xf32>
    %cst_16 = arith.constant 1.000000e+00 : f32
    %36 = vector.broadcast %cst_16 : f32 to vector<16x64xf32>
    %37 = arith.subf %36, %35 : vector<16x64xf32>
    %cst_17 = arith.constant 0.000000e+00 : f32
    %38 = vector.broadcast %cst_17 : f32 to vector<16x64xf32>
    %39 = arith.cmpf oge, %9, %38 : vector<16x64xf32>
    %cst_18 = arith.constant 0.000000e+00 : f32
    %40 = vector.broadcast %cst_18 : f32 to vector<16x64xf32>
    %41 = arith.subf %40, %37 : vector<16x64xf32>
    %42 = arith.select %39, %37, %41 : vector<16x64xi1>, vector<16x64xf32>
    %cst_19 = arith.constant 1.000000e+00 : f32
    %43 = vector.broadcast %cst_19 : f32 to vector<16x64xf32>
    %44 = arith.addf %43, %42 : vector<16x64xf32>
    %45 = arith.mulf %7, %44 : vector<16x64xf32>
    %c0_20 = arith.constant 0 : index
    %c0_21 = arith.constant 0 : index
    %46 = vector.load %arg4[%c0_20, %c0_21] : memref<64x32xf32, #tpu.memory_space<vmem>>, vector<64x32xf32>
    %cst_22 = arith.constant dense<0.000000e+00> : vector<16x32xf32>
    %47 = tpu.matmul %45, %46, %cst_22 {dimension_numbers = #tpu.dot_dimension_numbers<[1], [0], [0], [1], [0, 0, 1, 1], [], []>} : vector<16x64xf32>, vector<64x32xf32>, vector<16x32xf32> -> vector<16x32xf32>
    %c0_23 = arith.constant 0 : index
    %c0_24 = arith.constant 0 : index
    %48 = vector.load %arg5[%c0_23, %c0_24] : memref<1x32xf32, #tpu.memory_space<vmem>>, vector<1x32xf32>
    %49 = vector.broadcast %48 : vector<1x32xf32> to vector<16x32xf32>
    %50 = arith.addf %47, %49 : vector<16x32xf32>
    %c0_25 = arith.constant 0 : index
    %c0_26 = arith.constant 0 : index
    %51 = vector.load %arg6[%c0_25, %c0_26] : memref<16x32xf32, #tpu.memory_space<vmem>>, vector<16x32xf32>
    tpu.vector_store %arg6[%c0_25, %c0_26], %50 {strides = array<i32>} : memref<16x32xf32, #tpu.memory_space<vmem>>, vector<16x32xf32>,
    return
  }
  func.func @transform_0(%arg0: i32) -> (i32, i32) {
    %c0_i32 = arith.constant 0 : i32
    %c0_i32_0 = arith.constant 0 : i32
    return %arg0, %c0_i32 : i32, i32
  }
  func.func @transform_1(%arg0: i32) -> (i32, i32) {
    %c0_i32 = arith.constant 0 : i32
    %c0_i32_0 = arith.constant 0 : i32
    %c0_i32_1 = arith.constant 0 : i32
    return %c0_i32, %c0_i32_0 : i32, i32
  }
  func.func @transform_2(%arg0: i32) -> (i32, i32) {
    %c0_i32 = arith.constant 0 : i32
    %c0_i32_0 = arith.constant 0 : i32
    %c0_i32_1 = arith.constant 0 : i32
    return %c0_i32, %c0_i32_0 : i32, i32
  }
  func.func @transform_3(%arg0: i32) -> (i32, i32) {
    %c0_i32 = arith.constant 0 : i32
    %c0_i32_0 = arith.constant 0 : i32
    %c0_i32_1 = arith.constant 0 : i32
    return %c0_i32, %c0_i32_0 : i32, i32
  }
  func.func @transform_4(%arg0: i32) -> (i32, i32) {
    %c0_i32 = arith.constant 0 : i32
    %c0_i32_0 = arith.constant 0 : i32
    %c0_i32_1 = arith.constant 0 : i32
    return %c0_i32, %c0_i32_0 : i32, i32
  }
  func.func @transform_5(%arg0: i32) -> (i32, i32) {
    %c0_i32 = arith.constant 0 : i32
    %c0_i32_0 = arith.constant 0 : i32
    return %arg0, %c0_i32 : i32, i32
  }
}

</mosaic_0001>

<llo_original>
// kernel: tpu_custom_call.1
$region0: #{tpu_custom_call.1}
  #allocation0 [shape = 'u32[]', space=smem, size = 0x4, offset = 0x4, fixed_abs, tag = 'smem constant byte address 0x4 - core index']
  #allocation1 [shape = 'u32[144,128]{1,0:T(1,128)}', space=vmem, size = 0x12000, scoped, tag = 'internal scratch']
  %s0 = inlined_call_operand.vmem [shape: f32[16,32], index: 0, kind: input, shape index: {}]
  %s1 = inlined_call_operand.vmem [shape: f32[32,64], index: 1, kind: input, shape index: {}]
  %s2 = inlined_call_operand.vmem [shape: f32[1,64], index: 2, kind: input, shape index: {}]
  %s3 = inlined_call_operand.vmem [shape: f32[64,32], index: 3, kind: input, shape index: {}]
  %s4 = inlined_call_operand.vmem [shape: f32[1,32], index: 4, kind: input, shape index: {}]
  %s5 = inlined_call_operand.hbm [shape: f32[16,32], index: 5, kind: output, shape index: {}]
  %s6 = sld [smem:[#allocation0]]
  $region30: #{tpu_custom_call.1} parent=0
    _
  %s8 = ssub.s32 1, %s6
  %s9 = scalar_select 0, %s8, %s6
  $region1: #{tpu_custom_call.1} parent=0
    #allocation2 [shape = 'u8[8192]{0}', space=vmem, size = 0x2000, scoped, tag = 'output window, operand 0, single buffered']
    #allocation3 [shape = 's32[1]{0}', space=sflag, size = 0x4, scoped, tag = 'scoped memory for tpu_custom_call.1']
    %10 = vsyncpa [#allocation3], 0
    // Predicated region
    $region2: #{tpu_custom_call.1} parent=1 // pred_check
      _
    $region3: #{tpu_custom_call.1} parent=1 // pred_check_branch
      %12 = sbr.rel (0) target = $region5
    $region4: #{tpu_custom_call.1} parent=1 // pred_region
      _
    $region5: #{tpu_custom_call.1} parent=1 // pred_fallthru
      _
    // Predicated region
    $region6: #{tpu_custom_call.1} parent=1 // pred_check
      _
    $region7: #{tpu_custom_call.1} parent=1 // pred_check_branch
      %14 = sbr.rel (0) target = $region9
    $region8: #{tpu_custom_call.1} parent=1 // pred_region
      _
    $region9: #{tpu_custom_call.1} parent=1 // pred_fallthru
      _
    // Predicated region
    $region10: #{tpu_custom_call.1} parent=1 // pred_check
      _
    $region11: #{tpu_custom_call.1} parent=1 // pred_check_branch
      %16 = sbr.rel (0) target = $region13
    $region12: #{tpu_custom_call.1} parent=1 // pred_region
      _
    $region13: #{tpu_custom_call.1} parent=1 // pred_fallthru
      _
    // Predicated region
    $region14: #{tpu_custom_call.1} parent=1 // pred_check
      _
    $region15: #{tpu_custom_call.1} parent=1 // pred_check_branch
      %18 = sbr.rel (0) target = $region17
    $region16: #{tpu_custom_call.1} parent=1 // pred_region
      _
    $region17: #{tpu_custom_call.1} parent=1 // pred_fallthru
      _
    // Predicated region
    $region18: #{tpu_custom_call.1} parent=1 // pred_check
      _
    $region19: #{tpu_custom_call.1} parent=1 // pred_check_branch
      %20 = sbr.rel (0) target = $region21
    $region20: #{tpu_custom_call.1} parent=1 // pred_region
      _
    $region21: #{tpu_custom_call.1} parent=1 // pred_fallthru
      _
    %v21 = vld [vmem:[%s0] sm:$0xff]
    %v22 = vld [vmem:[%s0 + $0x8] sm:$0xff]
    %v23 = vld [vmem:[%s1] sm:$0xff]
    %v24 = vld [vmem:[%s1 + $0x8] sm:$0xff]
    %v25 = vld [vmem:[%s1 + $0x10] sm:$0xff]
    %v26 = vld [vmem:[%s1 + $0x18] sm:$0xff]
    %v27 = vld [vmem:[%s2] sm:$0x1]
    %v29 = vlaneseq
    %v30 = vshrl.u32 %v29, 7
    %v31 = vsub.s32 0, %v30
    %v32 = vrot.slane %v27, %v31
    %vm34 = vcmask 261120
    %v36 = vsel %vm34, %v21, 0
    %v39 = vsel %vm34, %v22, 0
    %41 = vmatprep.subr.mxu0 0.0
    %42 = vmatpush1.msra.mxu0 %v23
    %43 = vmatprep.subr.mxu0 0.0
    %44 = vmatpush1.msra.mxu0 %v24
    %45 = vmatprep.subr.mxu0 0.0
    %46 = vmatpush1.msra.mxu0 %v25
    %47 = vmatprep.subr.mxu0 0.0
    %48 = vmatpush1.msra.mxu0 %v26
    %49 = vmatprep.subr.mxu0 0.0
    %50 = vmatpush1.msra.mxu0 0.0
    %51 = vmatprep.subr.mxu0 0.0
    %52 = vmatpush1.msra.mxu0 0.0
    %53 = vmatprep.subr.mxu0 0.0
    %54 = vmatpush1.msra.mxu0 0.0
    %55 = vmatprep.subr.mxu0 0.0
    %56 = vmatpush1.msra.mxu0 0.0
    %57 = vmatprep.subr.mxu0 0.0
    %58 = vmatpush1.msra.mxu0 0.0
    %59 = vmatprep.subr.mxu0 0.0
    %60 = vmatpush1.msra.mxu0 0.0
    %61 = vmatprep.subr.mxu0 0.0
    %62 = vmatpush1.msra.mxu0 0.0
    %63 = vmatprep.subr.mxu0 0.0
    %64 = vmatpush1.msra.mxu0 0.0
    %65 = vmatprep.subr.mxu0 0.0
    %66 = vmatpush1.msra.mxu0 0.0
    %67 = vmatprep.subr.mxu0 0.0
    %68 = vmatpush1.msra.mxu0 0.0
    %69 = vmatprep.subr.mxu0 0.0
    %70 = vmatpush1.msra.mxu0 0.0
    %71 = vmatprep.subr.mxu0 0.0
    %72 = vmatpush1.msra.mxu0 0.0
    %73 = vmatprep.subr.mxu0 0.0
    %74 = vmatpush1.msra.mxu0 0.0
    %75 = vmatprep.subr.mxu0 0.0
    %76 = vmatpush1.msra.mxu0 0.0
    %77 = vmatprep.subr.mxu0 0.0
    %78 = vmatpush1.msra.mxu0 0.0
    %79 = vmatprep.subr.mxu0 0.0
    %80 = vmatpush1.msra.mxu0 0.0
    %81 = vmatprep.subr.mxu0 0.0
    %82 = vmatpush1.msra.mxu0 0.0
    %83 = vmatprep.subr.mxu0 0.0
    %84 = vmatpush1.msra.mxu0 0.0
    %85 = vmatprep.subr.mxu0 0.0
    %86 = vmatpush1.msra.mxu0 0.0
    %87 = vmatprep.subr.mxu0 0.0
    %88 = vmatpush1.msra.mxu0 0.0
    %89 = vmatprep.subr.mxu0 0.0
    %90 = vmatpush1.msra.mxu0 0.0
    %91 = vmatprep.subr.mxu0 0.0
    %92 = vmatpush1.msra.mxu0 0.0
    %93 = vmatprep.subr.mxu0 0.0
    %94 = vmatpush1.msra.mxu0 0.0
    %95 = vmatprep.subr.mxu0 0.0
    %96 = vmatpush1.msra.mxu0 0.0
    %97 = vmatprep.subr.mxu0 0.0
    %98 = vmatpush1.msra.mxu0 0.0
    %99 = vmatprep.subr.mxu0 0.0
    %100 = vmatpush1.msra.mxu0 0.0
    %101 = vmatprep.subr.mxu0 0.0
    %102 = vmatpush1.msra.mxu0 0.0
    %103 = vmatprep.subr.mxu0 0.0
    %104 = vmatpush1.msra.mxu0 0.0
    %105 = vmatprep.mubr.f32.mxu0 0.0
    %106 = vmatmul.mubr.f32.gmra.mrb[0].mxu0 %v36
    %v107 = vpop.f32.mrb[0].mxu0
    %v108 = vadd.f32 %v32, %v107
    %v109 = vpop.f32.mrb[0].mxu0
    %110 = vmatprep.mubr.f32.mxu0 0.0
    %111 = vmatmul.mubr.f32.gmra.mrb[0].mxu0 %v39
    %v112 = vpop.f32.mrb[0].mxu0
    %v113 = vadd.f32 %v32, %v112
    %v114 = vpop.f32.mrb[0].mxu0
    %115 = vdwg.mxu0
    %v116 = vmul.f32 %v108, 0.5
    %v117 = vmul.f32 %v113, 0.5
    %v118 = vmul.f32 %v108, 0.70710677
    %v119 = vmul.f32 %v113, 0.70710677
    %v120 = vand.u32 2147483647, %v118
    %v121 = vand.u32 2147483647, %v119
    %v122 = vmul.f32 %v120, 0.3275911
    %v123 = vmul.f32 %v121, 0.3275911
    %v124 = vadd.f32 %v122, 1.0
    %v125 = vadd.f32 %v123, 1.0
    %v126 = vrcp.pop %v124
    %v127 = vmul.f32 1.0, %v126
    %v128 = vrcp.pop %v125
    %v129 = vmul.f32 1.0, %v128
    %v130 = vmul.f32 %v127, 1.0614054
    %v131 = vmul.f32 %v129, 1.0614054
    %v132 = vadd.f32 %v130, -1.4531521
    %v133 = vadd.f32 %v131, -1.4531521
    %v134 = vmul.f32 %v132, %v127
    %v135 = vmul.f32 %v133, %v129
    %v136 = vadd.f32 %v134, 1.4214138
    %v137 = vadd.f32 %v135, 1.4214138
    %v138 = vmul.f32 %v136, %v127
    %v139 = vmul.f32 %v137, %v129
    %v140 = vadd.f32 %v138, -0.28449672
    %v141 = vadd.f32 %v139, -0.28449672
    %v142 = vmul.f32 %v140, %v127
    %v143 = vmul.f32 %v141, %v129
    %v144 = vadd.f32 %v142, 0.2548296
    %v145 = vadd.f32 %v143, 0.2548296
    %v146 = vmul.f32 %v144, %v127
    %v147 = vmul.f32 %v145, %v129
    %v148 = vsub.f32 0.0, %v120
    %v149 = vsub.f32 0.0, %v121
    %v150 = vmul.f32 %v148, %v120
    %v151 = vmul.f32 %v149, %v121
    %v152 = vmul.f32 %v150, 1.442695
    %v153 = vpow.pop %v152
    %v154 = vmul.f32 %v151, 1.442695
    %v155 = vpow.pop %v154
    %v156 = vmul.f32 %v146, %v153
    %v157 = vmul.f32 %v147, %v155
    %v158 = vsub.f32 1.0, %v156
    %v159 = vsub.f32 1.0, %v157
    %vm160 = vcmp.ge.f32.partialorder %v118, 0.0
    %vm161 = vcmp.ge.f32.partialorder %v119, 0.0
    %v162 = vsub.f32 0.0, %v158
    %v163 = vsub.f32 0.0, %v159
    %v164 = vsel %vm160, %v158, %v162
    %v165 = vsel %vm161, %v159, %v163
    %v166 = vadd.f32 %v164, 1.0
    %v167 = vadd.f32 %v165, 1.0
    %v168 = vmul.f32 %v116, %v166
    %v169 = vmul.f32 %v117, %v167
    %v170 = vld [vmem:[%s3] sm:$0xff]
    %v171 = vld [vmem:[%s3 + $0x8] sm:$0xff]
    %v172 = vld [vmem:[%s3 + $0x10] sm:$0xff]
    %v173 = vld [vmem:[%s3 + $0x18] sm:$0xff]
    %v174 = vld [vmem:[%s3 + $0x20] sm:$0xff]
    %v175 = vld [vmem:[%s3 + $0x28] sm:$0xff]
    %v176 = vld [vmem:[%s3 + $0x30] sm:$0xff]
    %v177 = vld [vmem:[%s3 + $0x38] sm:$0xff]
    %v178 = vld [vmem:[%s4] sm:$0x1]
    %v180 = vlaneseq
    %v181 = vshrl.u32 %v180, 7
    %v182 = vsub.s32 0, %v181
    %v183 = vrot.slane %v178, %v182
    %vm185 = vcmask 523264
    %v187 = vsel %vm185, %v168, 0
    %v190 = vsel %vm185, %v169, 0
    %192 = vmatprep.subr.mxu0 0.0
    %193 = vmatpush1.msra.mxu0 %v170
    %194 = vmatprep.subr.mxu0 0.0
    %195 = vmatpush1.msra.mxu0 %v171
    %196 = vmatprep.subr.mxu0 0.0
    %197 = vmatpush1.msra.mxu0 %v172
    %198 = vmatprep.subr.mxu0 0.0
    %199 = vmatpush1.msra.mxu0 %v173
    %200 = vmatprep.subr.mxu0 0.0
    %201 = vmatpush1.msra.mxu0 %v174
    %202 = vmatprep.subr.mxu0 0.0
    %203 = vmatpush1.msra.mxu0 %v175
    %204 = vmatprep.subr.mxu0 0.0
    %205 = vmatpush1.msra.mxu0 %v176
    %206 = vmatprep.subr.mxu0 0.0
    %207 = vmatpush1.msra.mxu0 %v177
    %208 = vmatprep.subr.mxu0 0.0
    %209 = vmatpush1.msra.mxu0 0.0
    %210 = vmatprep.subr.mxu0 0.0
    %211 = vmatpush1.msra.mxu0 0.0
    %212 = vmatprep.subr.mxu0 0.0
    %213 = vmatpush1.msra.mxu0 0.0
    %214 = vmatprep.subr.mxu0 0.0
    %215 = vmatpush1.msra.mxu0 0.0
    %216 = vmatprep.subr.mxu0 0.0
    %217 = vmatpush1.msra.mxu0 0.0
    %218 = vmatprep.subr.mxu0 0.0
    %219 = vmatpush1.msra.mxu0 0.0
    %220 = vmatprep.subr.mxu0 0.0
    %221 = vmatpush1.msra.mxu0 0.0
    %222 = vmatprep.subr.mxu0 0.0
    %223 = vmatpush1.msra.mxu0 0.0
    %224 = vmatprep.subr.mxu0 0.0
    %225 = vmatpush1.msra.mxu0 0.0
    %226 = vmatprep.subr.mxu0 0.0
    %227 = vmatpush1.msra.mxu0 0.0
    %228 = vmatprep.subr.mxu0 0.0
    %229 = vmatpush1.msra.mxu0 0.0
    %230 = vmatprep.subr.mxu0 0.0
    %231 = vmatpush1.msra.mxu0 0.0
    %232 = vmatprep.subr.mxu0 0.0
    %233 = vmatpush1.msra.mxu0 0.0
    %234 = vmatprep.subr.mxu0 0.0
    %235 = vmatpush1.msra.mxu0 0.0
    %236 = vmatprep.subr.mxu0 0.0
    %237 = vmatpush1.msra.mxu0 0.0
    %238 = vmatprep.subr.mxu0 0.0
    %239 = vmatpush1.msra.mxu0 0.0
    %240 = vmatprep.subr.mxu0 0.0
    %241 = vmatpush1.msra.mxu0 0.0
    %242 = vmatprep.subr.mxu0 0.0
    %243 = vmatpush1.msra.mxu0 0.0
    %244 = vmatprep.subr.mxu0 0.0
    %245 = vmatpush1.msra.mxu0 0.0
    %246 = vmatprep.subr.mxu0 0.0
    %247 = vmatpush1.msra.mxu0 0.0
    %248 = vmatprep.subr.mxu0 0.0
    %249 = vmatpush1.msra.mxu0 0.0
    %250 = vmatprep.subr.mxu0 0.0
    %251 = vmatpush1.msra.mxu0 0.0
    %252 = vmatprep.subr.mxu0 0.0
    %253 = vmatpush1.msra.mxu0 0.0
    %254 = vmatprep.subr.mxu0 0.0
    %255 = vmatpush1.msra.mxu0 0.0
    %256 = vmatprep.mubr.f32.mxu0 0.0
    %257 = vmatmul.mubr.f32.gmra.mrb[0].mxu0 %v187
    %v258 = vpop.f32.mrb[0].mxu0
    %v259 = vadd.f32 %v183, %v258
    %v260 = vpop.f32.mrb[0].mxu0
    %261 = vmatprep.mubr.f32.mxu0 0.0
    %262 = vmatmul.mubr.f32.gmra.mrb[0].mxu0 %v190
    %v263 = vpop.f32.mrb[0].mxu0
    %v264 = vadd.f32 %v183, %v263
    %v265 = vpop.f32.mrb[0].mxu0
    %266 = vdwg.mxu0
    %267 = vst.msk [vmem:[#allocation2] sm:$0xff] %vm34, %v259
    %268 = vst.msk [vmem:[#allocation2 + $0x8] sm:$0xff] %vm34, %v264
    // Predicated region
    $region22: #{tpu_custom_call.1} parent=1 // pred_check
      _
    $region23: #{tpu_custom_call.1} parent=1 // pred_check_branch
      %270 = sbr.rel (0) target = $region25
    $region24: #{tpu_custom_call.1} parent=1 // pred_region
      %s272 = ssub.s32 256, 256
      %273 = vsyncadd [#allocation3], %s272
      %s274 = sshll.u32 [#allocation2], 4
      %s275 = int_to_ptr.vmem [resolvable:$true] %s274
      %280 = dma.vmem_to_hbm [thread:$0]  %s275, 256, %s5, [#allocation3], 128, 128, 8
    $region25: #{tpu_custom_call.1} parent=1 // pred_fallthru
      _
    // Predicated region
    $region26: #{tpu_custom_call.1} parent=1 // pred_check
      _
    $region27: #{tpu_custom_call.1} parent=1 // pred_check_branch
      %282 = sbr.rel (0) target = $region29
    $region28: #{tpu_custom_call.1} parent=1 // pred_region
      %283 = dma.done [#allocation3], 256
    $region29: #{tpu_custom_call.1} parent=1 // pred_fallthru
      _
    %284 = vsyncpa [#allocation3], 1

</llo_original>
